<compile_context>
chip_gen: v7x
topology: tpu7x:2x2x1
jax: 0.10.0
libtpu: 0.0.40
codegen_flags: <defaults>
</compile_context>

<pallas_src>
import functools

import jax
import jax.numpy as jnp
from jax.experimental import pallas as pl
from jax.experimental.pallas import tpu as pltpu

NUM_CLASSES = 8
N_PAR = 2  # leading "parallel" grid axis (uses both TCs on v7x; harmless on v5e/v6e)


def _round_up(x, m):
    return (x + m - 1) // m * m


def _cdiv(a, b):
    return (a + b - 1) // b


# --------------------------------------------------------------------------
# Pallas kernel: streamed sum((rec - img)**2) with a one-vreg-row accumulator
# --------------------------------------------------------------------------
def _sse_kernel(img_ref, rec_ref, out_ref):
    """grid = (N_PAR, nsteps).

    img_ref / rec_ref : (tr, W) streamed blocks (tr % 8 == 0, W % 128 == 0).
    out_ref           : (8, W) f32 partial accumulator, resident across the
                        inner "arbitrary" axis (same block index for all k).
    """
    k = pl.program_id(1)

    @pl.when(k == 0)
    def _():
        out_ref[...] = jnp.zeros_like(out_ref)

    d = rec_ref[...].astype(jnp.float32) - img_ref[...].astype(jnp.float32)
    dd = d * d                                   # (tr, W), pure VPU
    tr, w = dd.shape
    # Fold the tr/8 sublane-tile groups with vreg-wise adds (layout-free
    # reshape: splits the second-minor dim at the sublane-tile boundary).
    out_ref[...] += jnp.sum(dd.reshape(tr // 8, 8, w), axis=0)


# --------------------------------------------------------------------------
# Wrapper: full capsule loss (margin + 0.0005 * SSE) / B
# --------------------------------------------------------------------------
def capsule_loss_pallas(images, labels, classes, reconstructions,
                        *, lane_width=1024, max_block_rows=1024):
    """(margin_loss + 0.0005 * sum((rec - images.reshape(B,-1))**2)) / B.

    Fast path: pass bf16 images/reconstructions to halve HBM streaming bytes;
    accumulation is always f32 inside the kernel.
    """
    assert images.size == reconstructions.size, "numel(images) != numel(recon)"
    assert lane_width % 128 == 0 and max_block_rows % 8 == 0
    B = reconstructions.shape[0]
    n = int(images.size)

    # ---- margin loss: tiny (B, C) elementwise term, plain JAX (per review)
    c = classes.astype(jnp.float32)
    l = labels.astype(jnp.float32)
    left = jnp.maximum(0.9 - c, 0.0)
    right = jnp.maximum(c - 0.1, 0.0)
    margin_loss = jnp.sum(l * left * left + 0.5 * (1.0 - l) * right * right)

    # ---- reconstruction SSE: streamed Pallas reduction over a (rows, W) view
    rows_min = _cdiv(n, lane_width)
    tr = min(max_block_rows, _round_up(_cdiv(rows_min, N_PAR), 8))
    rows_total = _round_up(rows_min, N_PAR * tr)
    nsteps = rows_total // (N_PAR * tr)
    padded = rows_total * lane_width

    img_flat = images.reshape(-1)
    rec_flat = reconstructions.reshape(-1)
    if padded != n:
        # zero padding contributes exactly 0 to the squared-error sum
        img_flat = jnp.pad(img_flat, (0, padded - n))
        rec_flat = jnp.pad(rec_flat, (0, padded - n))
    img2d = img_flat.reshape(rows_total, lane_width)
    rec2d = rec_flat.reshape(rows_total, lane_width)

    partials = pl.pallas_call(
        _sse_kernel,
        out_shape=jax.ShapeDtypeStruct((N_PAR, 8, lane_width), jnp.float32),
        grid_spec=pltpu.PrefetchScalarGridSpec(
            num_scalar_prefetch=0,
            grid=(N_PAR, nsteps),
            in_specs=[
                pl.BlockSpec((tr, lane_width), lambda i, k: (i * nsteps + k, 0)),
                pl.BlockSpec((tr, lane_width), lambda i, k: (i * nsteps + k, 0)),
            ],
            # leading dim squeezed: kernel sees an (8, W) accumulator block,
            # resident across the inner reduction axis.
            out_specs=pl.BlockSpec((None, 8, lane_width), lambda i, k: (i, 0, 0)),
        ),
        compiler_params=pltpu.CompilerParams(
            dimension_semantics=("parallel", "arbitrary"),
            vmem_limit_bytes=32 * 1024 * 1024,
        ),
    )(img2d, rec2d)

    recon_loss = jnp.sum(partials)           # tiny (N_PAR, 8, W) reduce, fused by XLA
    return (margin_loss + 0.0005 * recon_loss) / B


# --------------------------------------------------------------------------
# Plain-JAX reference (for the correctness check)
# --------------------------------------------------------------------------
def capsule_loss_ref(images, labels, classes, reconstructions):
    left = jnp.maximum(0.9 - classes, 0.0) ** 2
    right = jnp.maximum(classes - 0.1, 0.0) ** 2
    margin_loss = jnp.sum(labels * left + 0.5 * (1.0 - labels) * right)
    img_flat = images.reshape(reconstructions.shape[0], -1)
    recon_loss = jnp.sum((reconstructions - img_flat) ** 2)
    return (margin_loss + 0.0005 * recon_loss) / reconstructions.shape[0]


# --------------------------------------------------------------------------
if __name__ == "__main__":
    key = jax.random.PRNGKey(0)
    k_img, k_rec, k_cls, k_lab = jax.random.split(key, 4)

    # small shapes: batch=2, channels=4, spatial=16 -> D = 4*16*16 = 1024
    B, C, H, W_sp = 2, 4, 16, 16
    D = C * H * W_sp

    images = jax.random.uniform(k_img, (B, C, H, W_sp), jnp.float32)
    reconstructions = jax.random.uniform(k_rec, (B, D), jnp.float32)
    classes = jax.nn.softmax(
        jax.random.normal(k_cls, (B, NUM_CLASSES), jnp.float32), axis=-1)
    label_idx = jax.random.randint(k_lab, (B,), 0, NUM_CLASSES)
    labels = jax.nn.one_hot(label_idx, NUM_CLASSES, dtype=jnp.float32)

    # 1) default (large-block) configuration
    loss_fn = jax.jit(capsule_loss_pallas)
    loss = loss_fn(images, labels, classes, reconstructions)
    jax.block_until_ready(loss)
    expected = capsule_loss_ref(images, labels, classes, reconstructions)
    assert loss.shape == ()
    assert bool(jnp.isfinite(loss))
    assert bool(jnp.allclose(loss, expected, rtol=1e-5, atol=1e-5)), (loss, expected)

    # 2) small-block configuration to exercise the multi-step streaming /
    #    accumulation path (grid = (2, 4)) at demo-sized inputs.
    images2 = jax.random.uniform(k_img, (B, C, 32, 32), jnp.float32)
    recon2 = jax.random.uniform(k_rec, (B, C * 32 * 32), jnp.float32)
    loss_fn_small = jax.jit(functools.partial(
        capsule_loss_pallas, lane_width=128, max_block_rows=8))
    loss2 = loss_fn_small(images2, labels, classes, recon2)
    jax.block_until_ready(loss2)
    expected2 = capsule_loss_ref(images2, labels, classes, recon2)
    assert bool(jnp.allclose(loss2, expected2, rtol=1e-5, atol=1e-5)), (loss2, expected2)

    print("KERNEL_OK")
</pallas_src>

<mosaic_0001>
module attributes {stable_mosaic.version = 11 : i64} {
  func.func @_sse_kernel(%arg0: i32, %arg1: i32, %arg2: memref<8x1024xf32, #tpu.memory_space<vmem>>, %arg3: memref<8x1024xf32, #tpu.memory_space<vmem>>, %arg4: memref<1x8x1024xf32, #tpu.memory_space<vmem>>) attributes {dimension_semantics = [#tpu.dimension_semantics<parallel>, #tpu.dimension_semantics<arbitrary>], iteration_bounds = array<i64: 2, 1>, scalar_prefetch = 0 : i64, scratch_operands = 0 : i64, tpu.core_type = #tpu.core_type<tc>, window_params = [{transform_indices = @transform_0, window_bounds = array<i64: 8, 1024>}, {transform_indices = @transform_1, window_bounds = array<i64: 8, 1024>}, {transform_indices = @transform_2, window_bounds = array<i64: 1, 8, 1024>}]} {
    %c0_i32 = arith.constant 0 : i32
    %0 = arith.cmpi eq, %arg1, %c0_i32 : i32
    %1 = arith.extui %0 : i1 to i32
    %c0_i32_0 = arith.constant 0 : i32
    %2 = arith.cmpi ne, %1, %c0_i32_0 : i32
    scf.if %2 {
      %cst_10 = arith.constant 0.000000e+00 : f32
      %15 = vector.broadcast %cst_10 : f32 to vector<8x1024xf32>
      %c0_11 = arith.constant 0 : index
      %c0_12 = arith.constant 0 : index
      %c0_13 = arith.constant 0 : index
      %16 = vector.load %arg4[%c0_11, %c0_12, %c0_13] : memref<1x8x1024xf32, #tpu.memory_space<vmem>>, vector<1x8x1024xf32>
      %17 = vector.shape_cast %16 : vector<1x8x1024xf32> to vector<8x1024xf32>
      %18 = vector.shape_cast %15 : vector<8x1024xf32> to vector<1x8x1024xf32>
      tpu.vector_store %arg4[%c0_11, %c0_12, %c0_13], %18 {strides = array<i32>} : memref<1x8x1024xf32, #tpu.memory_space<vmem>>, vector<1x8x1024xf32>,
    } else {
    }
    %c0 = arith.constant 0 : index
    %c0_1 = arith.constant 0 : index
    %3 = vector.load %arg3[%c0, %c0_1] : memref<8x1024xf32, #tpu.memory_space<vmem>>, vector<8x1024xf32>
    %c0_2 = arith.constant 0 : index
    %c0_3 = arith.constant 0 : index
    %4 = vector.load %arg2[%c0_2, %c0_3] : memref<8x1024xf32, #tpu.memory_space<vmem>>, vector<8x1024xf32>
    %5 = arith.subf %3, %4 : vector<8x1024xf32>
    %6 = arith.mulf %5, %5 : vector<8x1024xf32>
    %c0_4 = arith.constant 0 : index
    %c0_5 = arith.constant 0 : index
    %c0_6 = arith.constant 0 : index
    %7 = vector.load %arg4[%c0_4, %c0_5, %c0_6] : memref<1x8x1024xf32, #tpu.memory_space<vmem>>, vector<1x8x1024xf32>
    %8 = vector.shape_cast %7 : vector<1x8x1024xf32> to vector<8x1024xf32>
    %9 = vector.shape_cast %6 : vector<8x1024xf32> to vector<1x8x1024xf32>
    %cst = arith.constant dense<0.000000e+00> : vector<8x1024xf32>
    %10 = vector.multi_reduction <add>, %9, %cst [0] : vector<1x8x1024xf32> to vector<8x1024xf32>
    %11 = arith.addf %8, %10 : vector<8x1024xf32>
    %c0_7 = arith.constant 0 : index
    %c0_8 = arith.constant 0 : index
    %c0_9 = arith.constant 0 : index
    %12 = vector.load %arg4[%c0_7, %c0_8, %c0_9] : memref<1x8x1024xf32, #tpu.memory_space<vmem>>, vector<1x8x1024xf32>
    %13 = vector.shape_cast %12 : vector<1x8x1024xf32> to vector<8x1024xf32>
    %14 = vector.shape_cast %11 : vector<8x1024xf32> to vector<1x8x1024xf32>
    tpu.vector_store %arg4[%c0_7, %c0_8, %c0_9], %14 {strides = array<i32>} : memref<1x8x1024xf32, #tpu.memory_space<vmem>>, vector<1x8x1024xf32>,
    return
  }
  func.func @transform_0(%arg0: i32, %arg1: i32) -> (i32, i32) {
    %c1_i32 = arith.constant 1 : i32
    %0 = arith.muli %arg0, %c1_i32 : i32
    %1 = arith.addi %0, %arg1 : i32
    %c0_i32 = arith.constant 0 : i32
    %c0_i32_0 = arith.constant 0 : i32
    return %1, %c0_i32 : i32, i32
  }
  func.func @transform_1(%arg0: i32, %arg1: i32) -> (i32, i32) {
    %c1_i32 = arith.constant 1 : i32
    %0 = arith.muli %arg0, %c1_i32 : i32
    %1 = arith.addi %0, %arg1 : i32
    %c0_i32 = arith.constant 0 : i32
    %c0_i32_0 = arith.constant 0 : i32
    return %1, %c0_i32 : i32, i32
  }
  func.func @transform_2(%arg0: i32, %arg1: i32) -> (i32, i32, i32) {
    %c0_i32 = arith.constant 0 : i32
    %c0_i32_0 = arith.constant 0 : i32
    %c0_i32_1 = arith.constant 0 : i32
    return %arg0, %c0_i32, %c0_i32_0 : i32, i32, i32
  }
}

</mosaic_0001>

<llo_original>
// kernel: capsule_loss_pallas.1
$region0: #{capsule_loss_pallas.1}
  #allocation0 [shape = 'u32[]', space=smem, size = 0x4, offset = 0x4, fixed_abs, tag = 'smem constant byte address 0x4 - core index']
  #allocation1 [shape = 'u32[144,128]{1,0:T(1,128)}', space=vmem, size = 0x12000, scoped, tag = 'internal scratch']
  %s0 = inlined_call_operand.vmem [shape: f32[16,1024], index: 0, kind: input, shape index: {}]
  %s1 = inlined_call_operand.vmem [shape: f32[16,1024], index: 1, kind: input, shape index: {}]
  %s2 = inlined_call_operand.vmem [shape: f32[2,8,1024], index: 2, kind: output, shape index: {}]
  %s3 = sld [smem:[#allocation0]]
  $region45: #{capsule_loss_pallas.1} parent=0
    _
  %s5 = ssub.s32 1, %s3
  %s6 = scalar_select 0, %s5, %s3
  loop: start=0, step=1, limit=4
  $region2: #{capsule_loss_pallas.1} parent=0 // loop_pre_header
    _
  $region3: #{capsule_loss_pallas.1} parent=0 // loop_header
    %s8 = sphi 0, %s12
    %p9 = scmp.ge.s32.totalorder %s8, 4
    %s15 = sphi 0, %s27
    %s16 = sphi 0, %s23
    %s17 = sphi 0, %s15
    %s18 = sphi 0, %s16
    %s19 = sphi 0, %s17
    %s20 = sphi 0, %s18
    %s32 = sphi 0, %s34
    %s35 = sphi 0, %s32
    %s36 = sphi 0, %s35
    %s52 = sphi 0, %s36
    %s60 = sphi 0, %s62
    %s63 = sphi 0, %s60
    %s64 = sphi 0, %s63
    %s80 = sphi 0, %s64
    %s86 = sphi 0, %s88
    %s89 = sphi 0, %s86
    %s90 = sphi 0, %s89
    %s106 = sphi 0, %s90
  $region4: #{capsule_loss_pallas.1} parent=0 // loop_header_branch
    %11 = sbr.rel (%p9) target = $region8
  $region5: #{capsule_loss_pallas.1} parent=0 // loop_body
    %s13 = ssub.s32 %s8, 1
    %s14 = ssub.s32 %s8, 2
    %s21 = sadd.s32 1, %s16
    %p22 = scmp.ge.s32.totalorder %s21, 1
    %s23 = scalar_select %p22, 0, %s21
    %s24 = sadd.s32 1, %s15
    %s25 = scalar_select %p22, %s24, %s15
    %p26 = scmp.ge.s32.totalorder %s25, 2
    %s27 = scalar_select %p26, 0, %s25
    %s28 = sadd.s32 %s15, %s16
    %s29 = sadd.s32 %s27, %s23
    %s30 = ssub.s32 %s28, %s29
    %p31 = scmp.eq.s32.totalorder %s30, 0
    %s33 = sadd.s32 %s32, 1
    %s34 = scalar_select %p31, %s32, %s33
    %p37 = pneg %p31
    %p38 = scmp.eq.s32.totalorder %s8, 1
    %p39 = por %p37, %p38
    %p40 = scmp.ne.s32.totalorder %s32, %s35
    %p41 = scmp.eq.s32.totalorder %s8, 0
    %p42 = por %p40, %p41
    %p43 = scmp.ne.s32.totalorder %s32, %s35
    %p44 = scmp.eq.s32.totalorder %s13, 1
    %p45 = por %p43, %p44
    %p46 = scmp.ne.s32.totalorder %s35, %s36
    %p47 = scmp.eq.s32.totalorder %s13, 0
    %p48 = por %p46, %p47
    %p49 = scmp.ne.s32.totalorder %s35, %s36
    %p50 = scmp.eq.s32.totalorder %s14, 1
    %p51 = por %p49, %p50
    %p53 = scmp.ne.s32.totalorder %s36, %s52
    %p54 = scmp.eq.s32.totalorder %s14, 0
    %p55 = por %p53, %p54
    %s56 = sadd.s32 %s15, %s16
    %s57 = sadd.s32 %s27, %s23
    %s58 = ssub.s32 %s56, %s57
    %p59 = scmp.eq.s32.totalorder %s58, 0
    %s61 = sadd.s32 %s60, 1
    %s62 = scalar_select %p59, %s60, %s61
    %p65 = pneg %p59
    %p66 = scmp.eq.s32.totalorder %s8, 1
    %p67 = por %p65, %p66
    %p68 = scmp.ne.s32.totalorder %s60, %s63
    %p69 = scmp.eq.s32.totalorder %s8, 0
    %p70 = por %p68, %p69
    %p71 = scmp.ne.s32.totalorder %s60, %s63
    %p72 = scmp.eq.s32.totalorder %s13, 1
    %p73 = por %p71, %p72
    %p74 = scmp.ne.s32.totalorder %s63, %s64
    %p75 = scmp.eq.s32.totalorder %s13, 0
    %p76 = por %p74, %p75
    %p77 = scmp.ne.s32.totalorder %s63, %s64
    %p78 = scmp.eq.s32.totalorder %s14, 1
    %p79 = por %p77, %p78
    %p81 = scmp.ne.s32.totalorder %s64, %s80
    %p82 = scmp.eq.s32.totalorder %s14, 0
    %p83 = por %p81, %p82
    %s84 = ssub.s32 %s15, %s27
    %p85 = scmp.eq.s32.totalorder %s84, 0
    %s87 = sadd.s32 %s86, 1
    %s88 = scalar_select %p85, %s86, %s87
    %p91 = pneg %p85
    %p92 = scmp.eq.s32.totalorder %s8, 1
    %p93 = por %p91, %p92
    %p94 = scmp.ne.s32.totalorder %s86, %s89
    %p95 = scmp.eq.s32.totalorder %s8, 0
    %p96 = por %p94, %p95
    %p97 = scmp.ne.s32.totalorder %s86, %s89
    %p98 = scmp.eq.s32.totalorder %s13, 1
    %p99 = por %p97, %p98
    %p100 = scmp.ne.s32.totalorder %s89, %s90
    %p101 = scmp.eq.s32.totalorder %s13, 0
    %p102 = por %p100, %p101
    %p103 = scmp.ne.s32.totalorder %s89, %s90
    %p104 = scmp.eq.s32.totalorder %s14, 1
    %p105 = por %p103, %p104
    %p107 = scmp.ne.s32.totalorder %s90, %s106
    %p108 = scmp.eq.s32.totalorder %s14, 0
    %p109 = por %p107, %p108
    %p110 = scmp.le.s32.totalorder 1, %s8
    %p111 = scmp.lt.s32.totalorder %s8, 3
    %p112 = pnand %p110, %p111
    %p113 = pneg %p112
    // Predicated region
    $region9: #{capsule_loss_pallas.1} parent=5 // pred_check
      _
    $region10: #{capsule_loss_pallas.1} parent=5 // pred_check_branch
      %115 = sbr.rel (%p112) target = $region12
    $region11: #{capsule_loss_pallas.1} parent=5 // pred_region
      %s116 = ssub.s32 %s8, 1
    $region12: #{capsule_loss_pallas.1} parent=5 // pred_fallthru
      _
    %p117 = scmp.lt.s32.totalorder %s8, 2
    // Predicated region
    $region13: #{capsule_loss_pallas.1} parent=5 // pred_check
      %p118 = pneg %p117
    $region14: #{capsule_loss_pallas.1} parent=5 // pred_check_branch
      %120 = sbr.rel (%p118) target = $region16
    $region15: #{capsule_loss_pallas.1} parent=5 // pred_region
      // Predicated region
      $region17: #{capsule_loss_pallas.1} parent=15 // pred_check
        %p121 = pneg %p42
      $region18: #{capsule_loss_pallas.1} parent=15 // pred_check_branch
        %123 = sbr.rel (%p121) target = $region20
      $region19: #{capsule_loss_pallas.1} parent=15 // pred_region
        %s124 = sadd.s32 %s15, %s16
        %p125 = scmp.lt.s32.totalorder %s124, 1
        %s126 = scalar_select %p125, %s124, 1
        %s127 = smul.addr %s126, 8
        %s128 = smul.addr %s127, 8
        %s129 = scalar_lea.vmem %s0, %s128
        %s130 = sadd.s32 %s15, %s16
      $region20: #{capsule_loss_pallas.1} parent=15 // pred_fallthru
        _
      // Predicated region
      $region21: #{capsule_loss_pallas.1} parent=15 // pred_check
        %p131 = pneg %p70
      $region22: #{capsule_loss_pallas.1} parent=15 // pred_check_branch
        %133 = sbr.rel (%p131) target = $region24
      $region23: #{capsule_loss_pallas.1} parent=15 // pred_region
        %s134 = sadd.s32 %s15, %s16
        %p135 = scmp.lt.s32.totalorder %s134, 1
        %s136 = scalar_select %p135, %s134, 1
        %s137 = smul.addr %s136, 8
        %s138 = smul.addr %s137, 8
        %s139 = scalar_lea.vmem %s1, %s138
        %s140 = sadd.s32 %s15, %s16
      $region24: #{capsule_loss_pallas.1} parent=15 // pred_fallthru
        _
    $region16: #{capsule_loss_pallas.1} parent=5 // pred_fallthru
      _
    %p141 = scmp.le.s32.totalorder 1, %s8
    %p142 = scmp.lt.s32.totalorder %s8, 3
    %p143 = pnand %p141, %p142
    %p144 = pneg %p143
    // Predicated region
    $region25: #{capsule_loss_pallas.1} parent=5 // pred_check
      _
    $region26: #{capsule_loss_pallas.1} parent=5 // pred_check_branch
      %146 = sbr.rel (%p143) target = $region28
    $region27: #{capsule_loss_pallas.1} parent=5 // pred_region
      %s147 = ssub.s32 %s8, 1
      %s148 = sadd.s32 %s17, %s18
      %p149 = scmp.lt.s32.totalorder %s148, 1
      %s150 = scalar_select %p149, %s148, 1
      %s151 = smul.addr %s150, 8
      %s152 = smul.addr %s151, 8
      %s153 = scalar_lea.vmem %s0, %s152
      %p154 = pneg %p48
      %p155 = pneg %p45
      %s156 = sadd.s32 %s17, %s18
      %p157 = scmp.lt.s32.totalorder %s156, 1
      %s158 = scalar_select %p157, %s156, 1
      %s159 = smul.addr %s158, 8
      %s160 = smul.addr %s159, 8
      %s161 = scalar_lea.vmem %s1, %s160
      %p162 = pneg %p76
      %p163 = pneg %p73
      %p164 = pneg %p102
      %p165 = pneg %p99
      %p166 = scmp.lt.s32.totalorder %s17, 1
      %s167 = scalar_select %p166, %s17, 1
      %s168 = smul.addr %s167, 8
      %s169 = smul.addr %s168, 8
      %s170 = scalar_lea.vmem %s2, %s169
      %s171 = sadd.s32 %s17, %s18
      %p172 = scmp.lt.s32.totalorder %s171, 1
      %s173 = scalar_select %p172, %s171, 1
      %s174 = smul.addr %s173, 8
      %s175 = smul.addr %s174, 8
      %s176 = scalar_lea.vmem %s0, %s175
      %s177 = sadd.s32 %s17, %s18
      %s178 = sadd.s32 %s17, %s18
      %p179 = scmp.lt.s32.totalorder %s178, 1
      %s180 = scalar_select %p179, %s178, 1
      %s181 = smul.addr %s180, 8
      %s182 = smul.addr %s181, 8
      %s183 = scalar_lea.vmem %s1, %s182
      %s184 = sadd.s32 %s17, %s18
      %p185 = scmp.lt.s32.totalorder %s17, 1
      %s186 = scalar_select %p185, %s17, 1
      %s187 = smul.addr %s186, 8
      %s188 = smul.addr %s187, 8
      %s189 = scalar_lea.vmem %s2, %s188
      %p190 = scmp.eq.s32.totalorder %s18, 0
      // Predicated region
      $region29: #{capsule_loss_pallas.1} parent=27 // pred_check
        %p191 = pneg %p190
      $region30: #{capsule_loss_pallas.1} parent=27 // pred_check_branch
        %193 = sbr.rel (%p191) target = $region32
      $region31: #{capsule_loss_pallas.1} parent=27 // pred_region
        %194 = vst [vmem:[%s189] sm:$0xff] 0.0
        %195 = vst [vmem:[%s189 + $0x8] sm:$0xff] 0.0
        %196 = vst [vmem:[%s189 + $0x10] sm:$0xff] 0.0
        %197 = vst [vmem:[%s189 + $0x18] sm:$0xff] 0.0
        %198 = vst [vmem:[%s189 + $0x20] sm:$0xff] 0.0
        %199 = vst [vmem:[%s189 + $0x28] sm:$0xff] 0.0
        %200 = vst [vmem:[%s189 + $0x30] sm:$0xff] 0.0
        %201 = vst [vmem:[%s189 + $0x38] sm:$0xff] 0.0
      $region32: #{capsule_loss_pallas.1} parent=27 // pred_fallthru
        _
      %v202 = vld [vmem:[%s183] sm:$0xff]
      %v203 = vld [vmem:[%s183 + $0x8] sm:$0xff]
      %v204 = vld [vmem:[%s183 + $0x10] sm:$0xff]
      %v205 = vld [vmem:[%s183 + $0x18] sm:$0xff]
      %v206 = vld [vmem:[%s183 + $0x20] sm:$0xff]
      %v207 = vld [vmem:[%s183 + $0x28] sm:$0xff]
      %v208 = vld [vmem:[%s183 + $0x30] sm:$0xff]
      %v209 = vld [vmem:[%s183 + $0x38] sm:$0xff]
      %v210 = vld [vmem:[%s176] sm:$0xff]
      %v211 = vld [vmem:[%s176 + $0x8] sm:$0xff]
      %v212 = vld [vmem:[%s176 + $0x10] sm:$0xff]
      %v213 = vld [vmem:[%s176 + $0x18] sm:$0xff]
      %v214 = vld [vmem:[%s176 + $0x20] sm:$0xff]
      %v215 = vld [vmem:[%s176 + $0x28] sm:$0xff]
      %v216 = vld [vmem:[%s176 + $0x30] sm:$0xff]
      %v217 = vld [vmem:[%s176 + $0x38] sm:$0xff]
      %v218 = vsub.f32 %v202, %v210
      %v219 = vsub.f32 %v203, %v211
      %v220 = vsub.f32 %v204, %v212
      %v221 = vsub.f32 %v205, %v213
      %v222 = vsub.f32 %v206, %v214
      %v223 = vsub.f32 %v207, %v215
      %v224 = vsub.f32 %v208, %v216
      %v225 = vsub.f32 %v209, %v217
      %v226 = vmul.f32 %v218, %v218
      %v227 = vmul.f32 %v219, %v219
      %v228 = vmul.f32 %v220, %v220
      %v229 = vmul.f32 %v221, %v221
      %v230 = vmul.f32 %v222, %v222
      %v231 = vmul.f32 %v223, %v223
      %v232 = vmul.f32 %v224, %v224
      %v233 = vmul.f32 %v225, %v225
      %v234 = vld [vmem:[%s189] sm:$0xff]
      %v235 = vld [vmem:[%s189 + $0x8] sm:$0xff]
      %v236 = vld [vmem:[%s189 + $0x10] sm:$0xff]
      %v237 = vld [vmem:[%s189 + $0x18] sm:$0xff]
      %v238 = vld [vmem:[%s189 + $0x20] sm:$0xff]
      %v239 = vld [vmem:[%s189 + $0x28] sm:$0xff]
      %v240 = vld [vmem:[%s189 + $0x30] sm:$0xff]
      %v241 = vld [vmem:[%s189 + $0x38] sm:$0xff]
      %v242 = vadd.f32 %v226, 0.0
      %v243 = vadd.f32 %v227, 0.0
      %v244 = vadd.f32 %v228, 0.0
      %v245 = vadd.f32 %v229, 0.0
      %v246 = vadd.f32 %v230, 0.0
      %v247 = vadd.f32 %v231, 0.0
      %v248 = vadd.f32 %v232, 0.0
      %v249 = vadd.f32 %v233, 0.0
      %v250 = vadd.f32 %v234, %v242
      %v251 = vadd.f32 %v235, %v243
      %v252 = vadd.f32 %v236, %v244
      %v253 = vadd.f32 %v237, %v245
      %v254 = vadd.f32 %v238, %v246
      %v255 = vadd.f32 %v239, %v247
      %v256 = vadd.f32 %v240, %v248
      %v257 = vadd.f32 %v241, %v249
      %258 = vst [vmem:[%s189] sm:$0xff] %v250
      %259 = vst [vmem:[%s189 + $0x8] sm:$0xff] %v251
      %260 = vst [vmem:[%s189 + $0x10] sm:$0xff] %v252
      %261 = vst [vmem:[%s189 + $0x18] sm:$0xff] %v253
      %262 = vst [vmem:[%s189 + $0x20] sm:$0xff] %v254
      %263 = vst [vmem:[%s189 + $0x28] sm:$0xff] %v255
      %264 = vst [vmem:[%s189 + $0x30] sm:$0xff] %v256
      %265 = vst [vmem:[%s189 + $0x38] sm:$0xff] %v257
      %p266 = scmp.lt.s32.totalorder %s17, 1
      %s267 = scalar_select %p266, %s17, 1
      %s268 = smul.addr %s267, 8
      %s269 = smul.addr %s268, 8
      %s270 = scalar_lea.vmem %s2, %s269
      // Predicated region
      $region33: #{capsule_loss_pallas.1} parent=27 // pred_check
        %p271 = pneg %p99
      $region34: #{capsule_loss_pallas.1} parent=27 // pred_check_branch
        %273 = sbr.rel (%p271) target = $region36
      $region35: #{capsule_loss_pallas.1} parent=27 // pred_region
        _
      $region36: #{capsule_loss_pallas.1} parent=27 // pred_fallthru
        _
    $region28: #{capsule_loss_pallas.1} parent=5 // pred_fallthru
      _
    %p274 = scmp.le.s32.totalorder 2, %s8
    // Predicated region
    $region37: #{capsule_loss_pallas.1} parent=5 // pred_check
      %p275 = pneg %p274
    $region38: #{capsule_loss_pallas.1} parent=5 // pred_check_branch
      %277 = sbr.rel (%p275) target = $region40
    $region39: #{capsule_loss_pallas.1} parent=5 // pred_region
      %s278 = ssub.s32 %s8, 2
      // Predicated region
      $region41: #{capsule_loss_pallas.1} parent=39 // pred_check
        %p279 = pneg %p105
      $region42: #{capsule_loss_pallas.1} parent=39 // pred_check_branch
        %281 = sbr.rel (%p279) target = $region44
      $region43: #{capsule_loss_pallas.1} parent=39 // pred_region
        %p282 = scmp.lt.s32.totalorder %s19, 1
        %s283 = scalar_select %p282, %s19, 1
        %s284 = smul.addr %s283, 8
        %s285 = smul.addr %s284, 8
        %s286 = scalar_lea.vmem %s2, %s285
      $region44: #{capsule_loss_pallas.1} parent=39 // pred_fallthru
        _
    $region40: #{capsule_loss_pallas.1} parent=5 // pred_fallthru
      _
  $region6: #{capsule_loss_pallas.1} parent=0 // loop_footer
    %s12 = sadd.s32 1, %s8
  $region7: #{capsule_loss_pallas.1} parent=0 // loop_footer_branch
    %7 = sbr.rel target = $region3
  $region8: #{capsule_loss_pallas.1} parent=0 // loop_exit
    _

</llo_original>
